<compile_context>
chip_gen: v7x
topology: tpu7x:2x2x1
jax: 0.10.0
libtpu: 0.0.40
codegen_flags: <defaults>
</compile_context>

<pallas_src>
import functools

import jax
import jax.numpy as jnp
from jax.experimental import pallas as pl
from jax.experimental.pallas import tpu as pltpu


def _round_up(x: int, m: int) -> int:
    return (x + m - 1) // m * m


def _apply_act(y, act: str):
    if act == "relu":
        return jnp.maximum(y, 0.0)
    if act == "gelu":
        # PyTorch nn.GELU() default is the exact (erf) formulation.
        return jax.nn.gelu(y, approximate=False)
    if act in ("none", "identity", "linear"):
        return y
    raise ValueError(f"unsupported activation: {act}")


# -----------------------------------------------------------------------------
# Small path: gridless, everything resident in VMEM (no pipeline overhead).
# -----------------------------------------------------------------------------
def _linear_act_small_kernel(x_ref, w_ref, b_ref, o_ref, *, act, mxu_bf16):
    x = x_ref[...]
    w = w_ref[...]
    if mxu_bf16:
        x = x.astype(jnp.bfloat16)
        w = w.astype(jnp.bfloat16)
    y = jnp.dot(x, w, preferred_element_type=jnp.float32)
    y = y + b_ref[...]
    o_ref[...] = _apply_act(y, act).astype(o_ref.dtype)


def _linear_act_small(xp, wp, bp, act, mxu_bf16):
    Bp, _ = xp.shape
    _, Foutp = wp.shape
    kernel = functools.partial(_linear_act_small_kernel, act=act, mxu_bf16=mxu_bf16)
    return pl.pallas_call(
        kernel,
        out_shape=jax.ShapeDtypeStruct((Bp, Foutp), xp.dtype),
        in_specs=[
            pl.BlockSpec(memory_space=pltpu.MemorySpace.VMEM),
            pl.BlockSpec(memory_space=pltpu.MemorySpace.VMEM),
            pl.BlockSpec(memory_space=pltpu.MemorySpace.VMEM),
        ],
        out_specs=pl.BlockSpec(memory_space=pltpu.MemorySpace.VMEM),
    )(xp, wp, bp)


# -----------------------------------------------------------------------------
# Large path: (M, N, K)-tiled grid with f32 accumulator scratch.
# -----------------------------------------------------------------------------
def _linear_act_tiled_kernel(x_ref, w_ref, b_ref, o_ref, acc_ref, *, act, mxu_bf16):
    k = pl.program_id(2)

    @pl.when(k == 0)
    def _():
        acc_ref[...] = jnp.zeros_like(acc_ref)

    x = x_ref[...]
    w = w_ref[...]
    if mxu_bf16:
        x = x.astype(jnp.bfloat16)
        w = w.astype(jnp.bfloat16)
    acc_ref[...] += jnp.dot(x, w, preferred_element_type=jnp.float32)

    @pl.when(k == pl.num_programs(2) - 1)
    def _():
        # Bias broadcast + activation only in the final-K epilogue.
        y = acc_ref[...] + b_ref[...]
        o_ref[...] = _apply_act(y, act).astype(o_ref.dtype)


def _linear_act_tiled(xp, wp, bp, act, mxu_bf16, tm, tn, tk):
    Bp, Finp = xp.shape
    _, Foutp = wp.shape
    grid = (Bp // tm, Foutp // tn, Finp // tk)
    kernel = functools.partial(_linear_act_tiled_kernel, act=act, mxu_bf16=mxu_bf16)
    return pl.pallas_call(
        kernel,
        out_shape=jax.ShapeDtypeStruct((Bp, Foutp), xp.dtype),
        grid_spec=pltpu.PrefetchScalarGridSpec(
            num_scalar_prefetch=0,
            grid=grid,
            in_specs=[
                pl.BlockSpec((tm, tk), lambda i, j, k: (i, k)),
                pl.BlockSpec((tk, tn), lambda i, j, k: (k, j)),
                pl.BlockSpec((1, tn), lambda i, j, k: (0, j)),
            ],
            out_specs=pl.BlockSpec((tm, tn), lambda i, j, k: (i, j)),
            scratch_shapes=[pltpu.VMEM((tm, tn), jnp.float32)],
        ),
        compiler_params=pltpu.CompilerParams(
            dimension_semantics=("parallel", "parallel", "arbitrary")
        ),
    )(xp, wp, bp)


# -----------------------------------------------------------------------------
# Wrapper: padding, path selection, un-padding.
# -----------------------------------------------------------------------------
_SMALL_VMEM_BYTES = 8 * 1024 * 1024  # use single-block path while it easily fits
_TM, _TN, _TK = 256, 256, 512        # tiled-path tile sizes (VMEM-safe everywhere)


def mlp_layer_forward(x, w, b, activation: str = "relu", mxu_bf16: bool = False):
    """y = activation(x @ w + b).  x: (..., Fin), w: (Fin, Fout), b: (Fout,)."""
    act = activation.lower()
    *lead, fin = x.shape
    x2 = x.reshape(-1, fin)
    batch = x2.shape[0]
    fin_w, fout = w.shape
    assert fin == fin_w, (fin, fin_w)

    # Lane-dense padding: batch -> multiple of 8 (sublanes), features -> 128 (lanes).
    bp_dim = _round_up(batch, 8)
    finp = _round_up(fin, 128)
    foutp = _round_up(fout, 128)

    fp32_bytes = 4 * (bp_dim * finp + finp * foutp + foutp + 2 * bp_dim * foutp)
    if fp32_bytes <= _SMALL_VMEM_BYTES:
        tm = tn = tk = None
    else:
        tm = min(_TM, bp_dim)
        tn = min(_TN, foutp)
        tk = min(_TK, finp)
        bp_dim = _round_up(batch, tm)
        foutp = _round_up(fout, tn)
        finp = _round_up(fin, tk)

    xp = jnp.pad(x2, ((0, bp_dim - batch), (0, finp - fin)))
    wp = jnp.pad(w, ((0, finp - fin), (0, foutp - fout)))
    bp = jnp.pad(b, (0, foutp - fout)).reshape(1, foutp)

    if tm is None:
        yp = _linear_act_small(xp, wp, bp, act, mxu_bf16)
    else:
        yp = _linear_act_tiled(xp, wp, bp, act, mxu_bf16, tm, tn, tk)

    y = yp[:batch, :fout]
    return y.reshape(*lead, fout)


# Pure-JAX reference (full-precision matmul for a fair numeric comparison).
def mlp_layer_reference(x, w, b, activation: str = "relu"):
    y = jnp.dot(x, w, precision="highest") + b
    return _apply_act(y, activation.lower())


if __name__ == "__main__":
    # Small shapes consistent with MLPLayer (single Linear + ReLU).
    batch = 8
    in_features = 32
    out_features = 16
    activation = "relu"  # MLPLayer's default nn.ReLU()

    key = jax.random.PRNGKey(0)
    kx, kw, kb = jax.random.split(key, 3)
    x = jax.random.normal(kx, (batch, in_features), dtype=jnp.float32)
    # Stored as [Fin, Fout] == transpose of torch nn.Linear's [Fout, Fin] weight.
    w = jax.random.normal(kw, (in_features, out_features), dtype=jnp.float32) * (
        1.0 / in_features**0.5
    )
    b = jax.random.normal(kb, (out_features,), dtype=jnp.float32) * 0.1

    out = mlp_layer_forward(x, w, b, activation)
    out = jax.block_until_ready(out)
    ref = mlp_layer_reference(x, w, b, activation)
    assert out.shape == (batch, out_features)
    assert jnp.allclose(out, ref, atol=1e-4, rtol=1e-4), "small-path mismatch"

    # Also exercise the tiled (M, N, K) path once with a larger layer.
    k2 = jax.random.PRNGKey(1)
    kx2, kw2, kb2 = jax.random.split(k2, 3)
    xl = jax.random.normal(kx2, (512, 1536), dtype=jnp.float32)
    wl = jax.random.normal(kw2, (1536, 768), dtype=jnp.float32) * (1.0 / 1536**0.5)
    bl = jax.random.normal(kb2, (768,), dtype=jnp.float32) * 0.1
    out_l = jax.block_until_ready(mlp_layer_forward(xl, wl, bl, activation))
    ref_l = mlp_layer_reference(xl, wl, bl, activation)
    assert jnp.allclose(out_l, ref_l, atol=2e-4, rtol=2e-4), "tiled-path mismatch"

    print("KERNEL_OK")
</pallas_src>

<mosaic_0001>
module attributes {stable_mosaic.version = 11 : i64} {
  func.func @_linear_act_small_kernel(%arg0: memref<8x128xf32, #tpu.memory_space<vmem>>, %arg1: memref<128x128xf32, #tpu.memory_space<vmem>>, %arg2: memref<1x128xf32, #tpu.memory_space<vmem>>, %arg3: memref<8x128xf32, #tpu.memory_space<vmem>>) attributes {dimension_semantics = [], scalar_prefetch = 0 : i64, scratch_operands = 0 : i64, tpu.core_type = #tpu.core_type<tc>} {
    %c0 = arith.constant 0 : index
    %c0_0 = arith.constant 0 : index
    %0 = vector.load %arg0[%c0, %c0_0] : memref<8x128xf32, #tpu.memory_space<vmem>>, vector<8x128xf32>
    %c0_1 = arith.constant 0 : index
    %c0_2 = arith.constant 0 : index
    %1 = vector.load %arg1[%c0_1, %c0_2] : memref<128x128xf32, #tpu.memory_space<vmem>>, vector<128x128xf32>
    %cst = arith.constant dense<0.000000e+00> : vector<8x128xf32>
    %2 = tpu.matmul %0, %1, %cst {dimension_numbers = #tpu.dot_dimension_numbers<[1], [0], [0], [1], [0, 0, 1, 1], [], []>} : vector<8x128xf32>, vector<128x128xf32>, vector<8x128xf32> -> vector<8x128xf32>
    %c0_3 = arith.constant 0 : index
    %c0_4 = arith.constant 0 : index
    %3 = vector.load %arg2[%c0_3, %c0_4] : memref<1x128xf32, #tpu.memory_space<vmem>>, vector<1x128xf32>
    %4 = vector.broadcast %3 : vector<1x128xf32> to vector<8x128xf32>
    %5 = arith.addf %2, %4 : vector<8x128xf32>
    %cst_5 = arith.constant 0.000000e+00 : f32
    %6 = vector.broadcast %cst_5 : f32 to vector<8x128xf32>
    %7 = arith.maximumf %5, %6 : vector<8x128xf32>
    %c0_6 = arith.constant 0 : index
    %c0_7 = arith.constant 0 : index
    %8 = vector.load %arg3[%c0_6, %c0_7] : memref<8x128xf32, #tpu.memory_space<vmem>>, vector<8x128xf32>
    tpu.vector_store %arg3[%c0_6, %c0_7], %7 {strides = array<i32>} : memref<8x128xf32, #tpu.memory_space<vmem>>, vector<8x128xf32>,
    return
  }
}

</mosaic_0001>

<llo_original>
// kernel: tpu_custom_call.1
$region0: #{tpu_custom_call.1}
  #allocation0 [shape = 'u32[]', space=smem, size = 0x4, offset = 0x4, fixed_abs, tag = 'smem constant byte address 0x4 - core index']
  #allocation1 [shape = 'u32[144,128]{1,0:T(1,128)}', space=vmem, size = 0x12000, scoped, tag = 'internal scratch']
  %s0 = inlined_call_operand.hbm [shape: f32[8,128], index: 0, kind: input, shape index: {}]
  %s1 = inlined_call_operand.hbm [shape: f32[128,128], index: 1, kind: input, shape index: {}]
  %s2 = inlined_call_operand.vmem [shape: f32[1,128], index: 2, kind: input, shape index: {}]
  %s3 = inlined_call_operand.hbm [shape: f32[8,128], index: 3, kind: output, shape index: {}]
  %s4 = sld [smem:[#allocation0]]
  $region30: #{tpu_custom_call.1} parent=0
    _
  %s6 = ssub.s32 1, %s4
  %s7 = scalar_select 0, %s6, %s4
  $region1: #{tpu_custom_call.1} parent=0
    #allocation2 [shape = 'u8[4096]{0}', space=vmem, size = 0x1000, scoped, tag = 'input window, operand 0, single buffered']
    #allocation3 [shape = 's32[1]{0}', space=sflag, size = 0x4, scoped, tag = 'scoped memory for tpu_custom_call.1']
    #allocation4 [shape = 's32[1]{0}', space=sflag, size = 0x4, scoped, tag = 'scoped memory for tpu_custom_call.1']
    #allocation5 [shape = 'u8[65536]{0}', space=vmem, size = 0x10000, scoped, tag = 'input window, operand 1, single buffered']
    #allocation6 [shape = 's32[1]{0}', space=sflag, size = 0x4, scoped, tag = 'scoped memory for tpu_custom_call.1']
    #allocation7 [shape = 'u8[4096]{0}', space=vmem, size = 0x1000, scoped, tag = 'output window, operand 0, single buffered']
    %8 = vsyncpa [#allocation3], 0
    %9 = vsyncpa [#allocation6], 0
    %10 = vsyncpa [#allocation4], 0
    // Predicated region
    $region2: #{tpu_custom_call.1} parent=1 // pred_check
      _
    $region3: #{tpu_custom_call.1} parent=1 // pred_check_branch
      %12 = sbr.rel (0) target = $region5
    $region4: #{tpu_custom_call.1} parent=1 // pred_region
      %s14 = ssub.s32 128, 128
      %15 = vsyncadd [#allocation3], %s14
      %s17 = sshll.u32 [#allocation2], 4
      %s18 = int_to_ptr.vmem [resolvable:$true] %s17
      %20 = dma.hbm_to_vmem [thread:$0]  %s0, 128, %s18, [#allocation3]
    $region5: #{tpu_custom_call.1} parent=1 // pred_fallthru
      _
    // Predicated region
    $region6: #{tpu_custom_call.1} parent=1 // pred_check
      _
    $region7: #{tpu_custom_call.1} parent=1 // pred_check_branch
      %22 = sbr.rel (0) target = $region9
    $region8: #{tpu_custom_call.1} parent=1 // pred_region
      %s24 = ssub.s32 2048, 2048
      %25 = vsyncadd [#allocation6], %s24
      %s26 = sshll.u32 [#allocation5], 4
      %s27 = int_to_ptr.vmem [resolvable:$true] %s26
      %32 = dma.hbm_to_vmem [thread:$0]  %s1, 2048, %s27, [#allocation6], 128, 128, 8
    $region9: #{tpu_custom_call.1} parent=1 // pred_fallthru
      _
    // Predicated region
    $region10: #{tpu_custom_call.1} parent=1 // pred_check
      _
    $region11: #{tpu_custom_call.1} parent=1 // pred_check_branch
      %34 = sbr.rel (0) target = $region13
    $region12: #{tpu_custom_call.1} parent=1 // pred_region
      _
    $region13: #{tpu_custom_call.1} parent=1 // pred_fallthru
      _
    // Predicated region
    $region14: #{tpu_custom_call.1} parent=1 // pred_check
      _
    $region15: #{tpu_custom_call.1} parent=1 // pred_check_branch
      %36 = sbr.rel (0) target = $region17
    $region16: #{tpu_custom_call.1} parent=1 // pred_region
      %37 = dma.done [#allocation3], 128
    $region17: #{tpu_custom_call.1} parent=1 // pred_fallthru
      _
    // Predicated region
    $region18: #{tpu_custom_call.1} parent=1 // pred_check
      _
    $region19: #{tpu_custom_call.1} parent=1 // pred_check_branch
      %39 = sbr.rel (0) target = $region21
    $region20: #{tpu_custom_call.1} parent=1 // pred_region
      %40 = dma.done [#allocation6], 2048
    $region21: #{tpu_custom_call.1} parent=1 // pred_fallthru
      _
    %v41 = vld [vmem:[#allocation2] sm:$0xff]
    %v42 = vld [vmem:[#allocation5] sm:$0xff]
    %v43 = vld [vmem:[#allocation5 + $0x8] sm:$0xff]
    %v44 = vld [vmem:[#allocation5 + $0x10] sm:$0xff]
    %v45 = vld [vmem:[#allocation5 + $0x18] sm:$0xff]
    %v46 = vld [vmem:[#allocation5 + $0x20] sm:$0xff]
    %v47 = vld [vmem:[#allocation5 + $0x28] sm:$0xff]
    %v48 = vld [vmem:[#allocation5 + $0x30] sm:$0xff]
    %v49 = vld [vmem:[#allocation5 + $0x38] sm:$0xff]
    %v50 = vld [vmem:[#allocation5 + $0x40] sm:$0xff]
    %v51 = vld [vmem:[#allocation5 + $0x48] sm:$0xff]
    %v52 = vld [vmem:[#allocation5 + $0x50] sm:$0xff]
    %v53 = vld [vmem:[#allocation5 + $0x58] sm:$0xff]
    %v54 = vld [vmem:[#allocation5 + $0x60] sm:$0xff]
    %v55 = vld [vmem:[#allocation5 + $0x68] sm:$0xff]
    %v56 = vld [vmem:[#allocation5 + $0x70] sm:$0xff]
    %v57 = vld [vmem:[#allocation5 + $0x78] sm:$0xff]
    %v58 = vld [vmem:[%s2] sm:$0x1]
    %v60 = vlaneseq
    %v61 = vshrl.u32 %v60, 7
    %v62 = vsub.s32 0, %v61
    %v63 = vrot.slane %v58, %v62
    %65 = vmatprep.subr.mxu0 0.0
    %66 = vmatpush1.msra.mxu0 %v42
    %67 = vmatprep.subr.mxu0 0.0
    %68 = vmatpush1.msra.mxu0 %v43
    %69 = vmatprep.subr.mxu0 0.0
    %70 = vmatpush1.msra.mxu0 %v44
    %71 = vmatprep.subr.mxu0 0.0
    %72 = vmatpush1.msra.mxu0 %v45
    %73 = vmatprep.subr.mxu0 0.0
    %74 = vmatpush1.msra.mxu0 %v46
    %75 = vmatprep.subr.mxu0 0.0
    %76 = vmatpush1.msra.mxu0 %v47
    %77 = vmatprep.subr.mxu0 0.0
    %78 = vmatpush1.msra.mxu0 %v48
    %79 = vmatprep.subr.mxu0 0.0
    %80 = vmatpush1.msra.mxu0 %v49
    %81 = vmatprep.subr.mxu0 0.0
    %82 = vmatpush1.msra.mxu0 %v50
    %83 = vmatprep.subr.mxu0 0.0
    %84 = vmatpush1.msra.mxu0 %v51
    %85 = vmatprep.subr.mxu0 0.0
    %86 = vmatpush1.msra.mxu0 %v52
    %87 = vmatprep.subr.mxu0 0.0
    %88 = vmatpush1.msra.mxu0 %v53
    %89 = vmatprep.subr.mxu0 0.0
    %90 = vmatpush1.msra.mxu0 %v54
    %91 = vmatprep.subr.mxu0 0.0
    %92 = vmatpush1.msra.mxu0 %v55
    %93 = vmatprep.subr.mxu0 0.0
    %94 = vmatpush1.msra.mxu0 %v56
    %95 = vmatprep.subr.mxu0 0.0
    %96 = vmatpush1.msra.mxu0 %v57
    %97 = vmatprep.subr.mxu0 0.0
    %98 = vmatpush1.msra.mxu0 0.0
    %99 = vmatprep.subr.mxu0 0.0
    %100 = vmatpush1.msra.mxu0 0.0
    %101 = vmatprep.subr.mxu0 0.0
    %102 = vmatpush1.msra.mxu0 0.0
    %103 = vmatprep.subr.mxu0 0.0
    %104 = vmatpush1.msra.mxu0 0.0
    %105 = vmatprep.subr.mxu0 0.0
    %106 = vmatpush1.msra.mxu0 0.0
    %107 = vmatprep.subr.mxu0 0.0
    %108 = vmatpush1.msra.mxu0 0.0
    %109 = vmatprep.subr.mxu0 0.0
    %110 = vmatpush1.msra.mxu0 0.0
    %111 = vmatprep.subr.mxu0 0.0
    %112 = vmatpush1.msra.mxu0 0.0
    %113 = vmatprep.subr.mxu0 0.0
    %114 = vmatpush1.msra.mxu0 0.0
    %115 = vmatprep.subr.mxu0 0.0
    %116 = vmatpush1.msra.mxu0 0.0
    %117 = vmatprep.subr.mxu0 0.0
    %118 = vmatpush1.msra.mxu0 0.0
    %119 = vmatprep.subr.mxu0 0.0
    %120 = vmatpush1.msra.mxu0 0.0
    %121 = vmatprep.subr.mxu0 0.0
    %122 = vmatpush1.msra.mxu0 0.0
    %123 = vmatprep.subr.mxu0 0.0
    %124 = vmatpush1.msra.mxu0 0.0
    %125 = vmatprep.subr.mxu0 0.0
    %126 = vmatpush1.msra.mxu0 0.0
    %127 = vmatprep.subr.mxu0 0.0
    %128 = vmatpush1.msra.mxu0 0.0
    %129 = vmatprep.mubr.f32.mxu0 0.0
    %130 = vmatmul.mubr.f32.gmra.mrb[0].mxu0 %v41
    %v131 = vpop.f32.mrb[0].mxu0
    %v132 = vadd.f32 %v63, %v131
    %v133 = vpop.f32.mrb[0].mxu0
    %134 = vdwg.mxu0
    %v135 = vmax.f32 %v132, 0.0
    %136 = vst [vmem:[#allocation7] sm:$0xff] %v135
    // Predicated region
    $region22: #{tpu_custom_call.1} parent=1 // pred_check
      _
    $region23: #{tpu_custom_call.1} parent=1 // pred_check_branch
      %138 = sbr.rel (0) target = $region25
    $region24: #{tpu_custom_call.1} parent=1 // pred_region
      %s140 = ssub.s32 128, 128
      %141 = vsyncadd [#allocation4], %s140
      %s143 = sshll.u32 [#allocation7], 4
      %s144 = int_to_ptr.vmem [resolvable:$true] %s143
      %146 = dma.vmem_to_hbm [thread:$0]  %s144, 128, %s3, [#allocation4]
    $region25: #{tpu_custom_call.1} parent=1 // pred_fallthru
      _
    // Predicated region
    $region26: #{tpu_custom_call.1} parent=1 // pred_check
      _
    $region27: #{tpu_custom_call.1} parent=1 // pred_check_branch
      %148 = sbr.rel (0) target = $region29
    $region28: #{tpu_custom_call.1} parent=1 // pred_region
      %149 = dma.done [#allocation4], 128
    $region29: #{tpu_custom_call.1} parent=1 // pred_fallthru
      _
    %150 = vsyncpa [#allocation3], 1
    %151 = vsyncpa [#allocation6], 1
    %152 = vsyncpa [#allocation4], 1

</llo_original>
